<compile_context>
chip_gen: v7x
topology: tpu7x:2x2x1
jax: 0.10.0
libtpu: 0.0.40
codegen_flags: <defaults>
</compile_context>

<pallas_src>
import functools

import jax
import jax.numpy as jnp
from jax.experimental import pallas as pl
from jax.experimental.pallas import tpu as pltpu


def _round_up(n, m):
    return (n + m - 1) // m * m


def _actor_mlp_kernel(x_ref, w1_ref, b1_ref, w2_ref, b2_ref, w3_ref, b3_ref,
                      logits_ref):
    # Weights arrive pre-cast to the MXU dtype (bf16 by default, f32 for the
    # strict path).  x is f32 in HBM; cast it here on the VPU (free slack).
    mm_dtype = w1_ref.dtype
    x = x_ref[...].astype(mm_dtype)

    # Layer 1: MXU matmul with f32 accumulation + f32 bias/ReLU on the VPU.
    h = jnp.dot(x, w1_ref[...], preferred_element_type=jnp.float32) + b1_ref[...]
    h = jnp.maximum(h, 0.0)
    # Layer 2.
    h = jnp.dot(h.astype(mm_dtype), w2_ref[...],
                preferred_element_type=jnp.float32) + b2_ref[...]
    h = jnp.maximum(h, 0.0)
    # Layer 3 -> narrow (tb, action_dim) logits; no lane padding (write-bound
    # kernel: fewer HBM bytes beats fully dense vst at action_dim=6).
    logits = jnp.dot(h.astype(mm_dtype), w3_ref[...],
                     preferred_element_type=jnp.float32) + b3_ref[...]
    logits_ref[...] = logits.astype(logits_ref.dtype)


def prepare_params(params, compute_dtype=jnp.bfloat16):
    """One-time weight cast for the MXU (do this OUTSIDE the hot call path).

    Biases stay f32 (bias/ReLU epilogue is always f32); only the matmul
    operands (weights) are cast.  bf16 is safe on v5e/v6e/v7x: the MXU runs
    bf16 at full rate and accumulation stays f32.
    """
    w1, b1, w2, b2, w3, b3 = params
    return (w1.astype(compute_dtype), b1.astype(jnp.float32),
            w2.astype(compute_dtype), b2.astype(jnp.float32),
            w3.astype(compute_dtype), b3.astype(jnp.float32))


def discrete_sac_actor_forward(x, prepared_params, *, block_batch=2048):
    """Matches DiscreteSACActor.forward: returns raw logits (B, action_dim) f32.

    `prepared_params` must come from prepare_params() (weights already in the
    desired MXU dtype).  x stays f32; the kernel casts it in VMEM.
    """
    w1, b1, w2, b2, w3, b3 = prepared_params
    B, obs_dim = x.shape
    assert w1.shape[0] == obs_dim
    hidden = w1.shape[1]
    action_dim = w3.shape[1]

    # Batch tiling.  tb multiple of 16 for bf16 operands (sublane packing),
    # 8 otherwise.  Large default tile: per-step VMEM is tiny (weights are
    # resident, activations ~ tb*hidden*4 B), so amortize the ~0.35 us
    # per-grid-step overhead with big tiles.
    tile_mult = 16 if w1.dtype == jnp.bfloat16 else 8
    tb = min(_round_up(block_batch, tile_mult), _round_up(B, tile_mult))
    b_pad = _round_up(B, tb)
    # Ensure >= 2 grid steps so the "parallel" batch axis can shard across
    # v7x's 2 TensorCores (and the DMA pipeline actually pipelines).
    if b_pad == tb and tb >= 2 * tile_mult:
        tb = _round_up(tb // 2, tile_mult)
        b_pad = _round_up(B, tb)
    if b_pad != B:
        # Fallback only; prefer B % tb == 0 to avoid this extra pass over x.
        x = jnp.pad(x, ((0, b_pad - B), (0, 0)))

    const = lambda a: pl.BlockSpec(a.shape, lambda i: (0, 0))  # VMEM-resident

    logits = pl.pallas_call(
        _actor_mlp_kernel,
        out_shape=jax.ShapeDtypeStruct((b_pad, action_dim), jnp.float32),
        grid=(b_pad // tb,),
        in_specs=[pl.BlockSpec((tb, obs_dim), lambda i: (i, 0)),
                  const(w1), const(b1), const(w2), const(b2),
                  const(w3), const(b3)],
        out_specs=pl.BlockSpec((tb, action_dim), lambda i: (i, 0)),
        compiler_params=pltpu.CompilerParams(
            dimension_semantics=("parallel",)),
    )(x, w1, b1, w2, b2, w3, b3)

    return logits[:B] if b_pad != B else logits


def discrete_sac_actor_probs(x, prepared_params, compute_log_pi=False,
                             **kwargs):
    """Matches DiscreteSACActor.probs: (probs, None) or (probs, entropy).

    Softmax/entropy are cheap JAX glue on the narrow (B, action_dim) logits;
    fusing them into the (write-bound) kernel would only add output bytes.
    """
    logits = discrete_sac_actor_forward(x, prepared_params, **kwargs)
    probs = jax.nn.softmax(logits, axis=-1)
    if not compute_log_pi:
        return probs, None
    logp = jax.nn.log_softmax(logits, axis=-1)
    entropy = -jnp.sum(probs * logp, axis=-1)
    return probs, entropy


def init_params(key, obs_dim, action_dim, hidden_dim):
    """Deterministic Xavier-uniform weights, biases = 1e-8 (as init_weights)."""
    dims = [(obs_dim, hidden_dim), (hidden_dim, hidden_dim),
            (hidden_dim, action_dim)]
    params = []
    for fan_in, fan_out in dims:
        key, sub = jax.random.split(key)
        bound = jnp.sqrt(6.0 / (fan_in + fan_out))
        w = jax.random.uniform(sub, (fan_in, fan_out), jnp.float32,
                               minval=-bound, maxval=bound)
        b = jnp.full((1, fan_out), 1e-8, jnp.float32)
        params += [w, b]
    return tuple(params)


def _reference_forward(x, params):
    w1, b1, w2, b2, w3, b3 = params
    h = jnp.maximum(x @ w1 + b1, 0.0)
    h = jnp.maximum(h @ w2 + b2, 0.0)
    return h @ w3 + b3


if __name__ == "__main__":
    # Small shapes consistent with the module (flat-obs MLP, Discrete actions).
    batch = 32
    obs_dim = 16        # observation_space.shape[0]
    hidden_dim = 128    # module default is 256; 128 keeps the demo small
    action_dim = 6      # action_space.n

    key = jax.random.PRNGKey(0)
    key, xkey = jax.random.split(key)
    x = jax.random.normal(xkey, (batch, obs_dim), jnp.float32)
    params = init_params(key, obs_dim, action_dim, hidden_dim)

    ref_logits = _reference_forward(x, params)
    ref_probs = jax.nn.softmax(ref_logits, axis=-1)

    # Strict f32 path (weights kept f32): tight tolerance vs. the JAX reference.
    params_f32 = prepare_params(params, compute_dtype=jnp.float32)
    fwd_f32 = jax.jit(functools.partial(discrete_sac_actor_forward,
                                        block_batch=2048))
    logits_f32 = fwd_f32(x, params_f32)
    jax.block_until_ready(logits_f32)
    assert logits_f32.shape == (batch, action_dim)
    assert jnp.allclose(logits_f32, ref_logits, atol=1e-5, rtol=1e-5)

    # Default bf16-MXU path (all chips): halved operand bytes, f32 accumulation
    # and f32 bias/ReLU epilogue.
    params_bf16 = prepare_params(params, compute_dtype=jnp.bfloat16)
    fwd_bf16 = jax.jit(functools.partial(discrete_sac_actor_forward,
                                         block_batch=2048))
    logits_bf16 = fwd_bf16(x, params_bf16)
    jax.block_until_ready(logits_bf16)
    assert jnp.allclose(logits_bf16, ref_logits, atol=5e-2, rtol=5e-2)

    # probs() / entropy as downstream JAX glue (exact softmax, no approx recip).
    probs, entropy = jax.jit(
        functools.partial(discrete_sac_actor_probs, compute_log_pi=True)
    )(x, params_f32)
    jax.block_until_ready((probs, entropy))
    assert probs.shape == (batch, action_dim)
    assert jnp.allclose(probs, ref_probs, atol=1e-5, rtol=1e-5)
    assert jnp.allclose(jnp.sum(probs, axis=-1), 1.0, atol=1e-5)

    print("KERNEL_OK")
</pallas_src>

<mosaic_0001>
module attributes {stable_mosaic.version = 11 : i64} {
  func.func @_actor_mlp_kernel(%arg0: i32, %arg1: memref<16x16xf32, #tpu.memory_space<vmem>>, %arg2: memref<16x128xf32, #tpu.memory_space<vmem>>, %arg3: memref<1x128xf32, #tpu.memory_space<vmem>>, %arg4: memref<128x128xf32, #tpu.memory_space<vmem>>, %arg5: memref<1x128xf32, #tpu.memory_space<vmem>>, %arg6: memref<128x6xf32, #tpu.memory_space<vmem>>, %arg7: memref<1x6xf32, #tpu.memory_space<vmem>>, %arg8: memref<16x6xf32, #tpu.memory_space<vmem>>) attributes {dimension_semantics = [#tpu.dimension_semantics<parallel>], iteration_bounds = array<i64: 2>, scalar_prefetch = 0 : i64, scratch_operands = 0 : i64, tpu.core_type = #tpu.core_type<tc>, window_params = [{transform_indices = @transform_0, window_bounds = array<i64: 16, 16>}, {pipeline_mode = #tpu.pipeline_mode<synchronous>, transform_indices = @transform_1, window_bounds = array<i64: 16, 128>}, {pipeline_mode = #tpu.pipeline_mode<synchronous>, transform_indices = @transform_2, window_bounds = array<i64: 1, 128>}, {pipeline_mode = #tpu.pipeline_mode<synchronous>, transform_indices = @transform_3, window_bounds = array<i64: 128, 128>}, {pipeline_mode = #tpu.pipeline_mode<synchronous>, transform_indices = @transform_4, window_bounds = array<i64: 1, 128>}, {pipeline_mode = #tpu.pipeline_mode<synchronous>, transform_indices = @transform_5, window_bounds = array<i64: 128, 6>}, {pipeline_mode = #tpu.pipeline_mode<synchronous>, transform_indices = @transform_6, window_bounds = array<i64: 1, 6>}, {transform_indices = @transform_7, window_bounds = array<i64: 16, 6>}]} {
    %c0 = arith.constant 0 : index
    %c0_0 = arith.constant 0 : index
    %0 = vector.load %arg1[%c0, %c0_0] : memref<16x16xf32, #tpu.memory_space<vmem>>, vector<16x16xf32>
    %c0_1 = arith.constant 0 : index
    %c0_2 = arith.constant 0 : index
    %1 = vector.load %arg2[%c0_1, %c0_2] : memref<16x128xf32, #tpu.memory_space<vmem>>, vector<16x128xf32>
    %cst = arith.constant dense<0.000000e+00> : vector<16x128xf32>
    %2 = tpu.matmul %0, %1, %cst {dimension_numbers = #tpu.dot_dimension_numbers<[1], [0], [0], [1], [0, 0, 1, 1], [], []>} : vector<16x16xf32>, vector<16x128xf32>, vector<16x128xf32> -> vector<16x128xf32>
    %c0_3 = arith.constant 0 : index
    %c0_4 = arith.constant 0 : index
    %3 = vector.load %arg3[%c0_3, %c0_4] : memref<1x128xf32, #tpu.memory_space<vmem>>, vector<1x128xf32>
    %4 = vector.broadcast %3 : vector<1x128xf32> to vector<16x128xf32>
    %5 = arith.addf %2, %4 : vector<16x128xf32>
    %cst_5 = arith.constant 0.000000e+00 : f32
    %6 = vector.broadcast %cst_5 : f32 to vector<16x128xf32>
    %7 = arith.maximumf %5, %6 : vector<16x128xf32>
    %c0_6 = arith.constant 0 : index
    %c0_7 = arith.constant 0 : index
    %8 = vector.load %arg4[%c0_6, %c0_7] : memref<128x128xf32, #tpu.memory_space<vmem>>, vector<128x128xf32>
    %cst_8 = arith.constant dense<0.000000e+00> : vector<16x128xf32>
    %9 = tpu.matmul %7, %8, %cst_8 {dimension_numbers = #tpu.dot_dimension_numbers<[1], [0], [0], [1], [0, 0, 1, 1], [], []>} : vector<16x128xf32>, vector<128x128xf32>, vector<16x128xf32> -> vector<16x128xf32>
    %c0_9 = arith.constant 0 : index
    %c0_10 = arith.constant 0 : index
    %10 = vector.load %arg5[%c0_9, %c0_10] : memref<1x128xf32, #tpu.memory_space<vmem>>, vector<1x128xf32>
    %11 = vector.broadcast %10 : vector<1x128xf32> to vector<16x128xf32>
    %12 = arith.addf %9, %11 : vector<16x128xf32>
    %cst_11 = arith.constant 0.000000e+00 : f32
    %13 = vector.broadcast %cst_11 : f32 to vector<16x128xf32>
    %14 = arith.maximumf %12, %13 : vector<16x128xf32>
    %c0_12 = arith.constant 0 : index
    %c0_13 = arith.constant 0 : index
    %15 = vector.load %arg6[%c0_12, %c0_13] : memref<128x6xf32, #tpu.memory_space<vmem>>, vector<128x6xf32>
    %cst_14 = arith.constant dense<0.000000e+00> : vector<16x6xf32>
    %16 = tpu.matmul %14, %15, %cst_14 {dimension_numbers = #tpu.dot_dimension_numbers<[1], [0], [0], [1], [0, 0, 1, 1], [], []>} : vector<16x128xf32>, vector<128x6xf32>, vector<16x6xf32> -> vector<16x6xf32>
    %c0_15 = arith.constant 0 : index
    %c0_16 = arith.constant 0 : index
    %17 = vector.load %arg7[%c0_15, %c0_16] : memref<1x6xf32, #tpu.memory_space<vmem>>, vector<1x6xf32>
    %18 = vector.broadcast %17 : vector<1x6xf32> to vector<16x6xf32>
    %19 = arith.addf %16, %18 : vector<16x6xf32>
    %c0_17 = arith.constant 0 : index
    %c0_18 = arith.constant 0 : index
    %20 = vector.load %arg8[%c0_17, %c0_18] : memref<16x6xf32, #tpu.memory_space<vmem>>, vector<16x6xf32>
    tpu.vector_store %arg8[%c0_17, %c0_18], %19 {strides = array<i32>} : memref<16x6xf32, #tpu.memory_space<vmem>>, vector<16x6xf32>,
    return
  }
  func.func @transform_0(%arg0: i32) -> (i32, i32) {
    %c0_i32 = arith.constant 0 : i32
    %c0_i32_0 = arith.constant 0 : i32
    return %arg0, %c0_i32 : i32, i32
  }
  func.func @transform_1(%arg0: i32) -> (i32, i32) {
    %c0_i32 = arith.constant 0 : i32
    %c0_i32_0 = arith.constant 0 : i32
    %c0_i32_1 = arith.constant 0 : i32
    return %c0_i32, %c0_i32_0 : i32, i32
  }
  func.func @transform_2(%arg0: i32) -> (i32, i32) {
    %c0_i32 = arith.constant 0 : i32
    %c0_i32_0 = arith.constant 0 : i32
    %c0_i32_1 = arith.constant 0 : i32
    return %c0_i32, %c0_i32_0 : i32, i32
  }
  func.func @transform_3(%arg0: i32) -> (i32, i32) {
    %c0_i32 = arith.constant 0 : i32
    %c0_i32_0 = arith.constant 0 : i32
    %c0_i32_1 = arith.constant 0 : i32
    return %c0_i32, %c0_i32_0 : i32, i32
  }
  func.func @transform_4(%arg0: i32) -> (i32, i32) {
    %c0_i32 = arith.constant 0 : i32
    %c0_i32_0 = arith.constant 0 : i32
    %c0_i32_1 = arith.constant 0 : i32
    return %c0_i32, %c0_i32_0 : i32, i32
  }
  func.func @transform_5(%arg0: i32) -> (i32, i32) {
    %c0_i32 = arith.constant 0 : i32
    %c0_i32_0 = arith.constant 0 : i32
    %c0_i32_1 = arith.constant 0 : i32
    return %c0_i32, %c0_i32_0 : i32, i32
  }
  func.func @transform_6(%arg0: i32) -> (i32, i32) {
    %c0_i32 = arith.constant 0 : i32
    %c0_i32_0 = arith.constant 0 : i32
    %c0_i32_1 = arith.constant 0 : i32
    return %c0_i32, %c0_i32_0 : i32, i32
  }
  func.func @transform_7(%arg0: i32) -> (i32, i32) {
    %c0_i32 = arith.constant 0 : i32
    %c0_i32_0 = arith.constant 0 : i32
    return %arg0, %c0_i32 : i32, i32
  }
}

</mosaic_0001>

<llo_original>
// kernel: discrete_sac_actor_forward.1
$region0: #{discrete_sac_actor_forward.1}
  #allocation0 [shape = 'u32[]', space=smem, size = 0x4, offset = 0x4, fixed_abs, tag = 'smem constant byte address 0x4 - core index']
  #allocation1 [shape = 'u32[144,128]{1,0:T(1,128)}', space=vmem, size = 0x12000, scoped, tag = 'internal scratch']
  %s0 = inlined_call_operand.vmem [shape: f32[32,16], index: 0, kind: input, shape index: {}]
  %s1 = inlined_call_operand.vmem [shape: f32[16,128], index: 1, kind: input, shape index: {}]
  %s2 = inlined_call_operand.vmem [shape: f32[1,128], index: 2, kind: input, shape index: {}]
  %s3 = inlined_call_operand.vmem [shape: f32[128,128], index: 3, kind: input, shape index: {}]
  %s4 = inlined_call_operand.vmem [shape: f32[1,128], index: 4, kind: input, shape index: {}]
  %s5 = inlined_call_operand.vmem [shape: f32[128,6], index: 5, kind: input, shape index: {}]
  %s6 = inlined_call_operand.vmem [shape: f32[1,6], index: 6, kind: input, shape index: {}]
  %s7 = inlined_call_operand.vmem [shape: f32[32,6], index: 7, kind: output, shape index: {}]
  %s8 = sld [smem:[#allocation0]]
  $region61: #{discrete_sac_actor_forward.1} parent=0
    _
  %s10 = ssub.s32 1, %s8
  %s11 = scalar_select 0, %s10, %s8
  loop: start=0, step=1, limit=4
  $region2: #{discrete_sac_actor_forward.1} parent=0 // loop_pre_header
    _
  $region3: #{discrete_sac_actor_forward.1} parent=0 // loop_header
    %s13 = sphi 0, %s17
    %p14 = scmp.ge.s32.totalorder %s13, 4
    %s23 = sphi 0, %s25
    %s26 = sphi 0, %s23
    %s27 = sphi 0, %s26
    %s43 = sphi 0, %s27
    %s47 = sphi 0, %s47
    %s49 = sphi 0, %s47
    %s50 = sphi 0, %s49
    %s64 = sphi 0, %s50
    %s68 = sphi 0, %s68
    %s70 = sphi 0, %s68
    %s71 = sphi 0, %s70
    %s85 = sphi 0, %s71
    %s89 = sphi 0, %s89
    %s91 = sphi 0, %s89
    %s92 = sphi 0, %s91
    %s106 = sphi 0, %s92
    %s110 = sphi 0, %s110
    %s112 = sphi 0, %s110
    %s113 = sphi 0, %s112
    %s127 = sphi 0, %s113
    %s131 = sphi 0, %s131
    %s133 = sphi 0, %s131
    %s134 = sphi 0, %s133
    %s148 = sphi 0, %s134
    %s152 = sphi 0, %s152
    %s154 = sphi 0, %s152
    %s155 = sphi 0, %s154
    %s169 = sphi 0, %s155
    %s175 = sphi 0, %s177
    %s178 = sphi 0, %s175
    %s179 = sphi 0, %s178
    %s195 = sphi 0, %s179
  $region4: #{discrete_sac_actor_forward.1} parent=0 // loop_header_branch
    %16 = sbr.rel (%p14) target = $region8
  $region5: #{discrete_sac_actor_forward.1} parent=0 // loop_body
    %s18 = ssub.s32 %s13, 1
    %s19 = ssub.s32 %s13, 2
    %s20 = sadd.s32 %s13, 1
    %s21 = ssub.s32 %s13, %s20
    %p22 = scmp.eq.s32.totalorder %s21, 0
    %s24 = sadd.s32 %s23, 1
    %s25 = scalar_select %p22, %s23, %s24
    %p28 = pneg %p22
    %p29 = scmp.eq.s32.totalorder %s13, 1
    %p30 = por %p28, %p29
    %p31 = scmp.ne.s32.totalorder %s23, %s26
    %p32 = scmp.eq.s32.totalorder %s13, 0
    %p33 = por %p31, %p32
    %p34 = scmp.ne.s32.totalorder %s23, %s26
    %p35 = scmp.eq.s32.totalorder %s18, 1
    %p36 = por %p34, %p35
    %p37 = scmp.ne.s32.totalorder %s26, %s27
    %p38 = scmp.eq.s32.totalorder %s18, 0
    %p39 = por %p37, %p38
    %p40 = scmp.ne.s32.totalorder %s26, %s27
    %p41 = scmp.eq.s32.totalorder %s19, 1
    %p42 = por %p40, %p41
    %p44 = scmp.ne.s32.totalorder %s27, %s43
    %p45 = scmp.eq.s32.totalorder %s19, 0
    %p46 = por %p44, %p45
    %s48 = sadd.s32 %s47, 1
    %p51 = scmp.eq.s32.totalorder %s13, 1
    %p52 = scmp.ne.s32.totalorder %s47, %s49
    %p53 = scmp.eq.s32.totalorder %s13, 0
    %p54 = por %p52, %p53
    %p55 = scmp.ne.s32.totalorder %s47, %s49
    %p56 = scmp.eq.s32.totalorder %s18, 1
    %p57 = por %p55, %p56
    %p58 = scmp.ne.s32.totalorder %s49, %s50
    %p59 = scmp.eq.s32.totalorder %s18, 0
    %p60 = por %p58, %p59
    %p61 = scmp.ne.s32.totalorder %s49, %s50
    %p62 = scmp.eq.s32.totalorder %s19, 1
    %p63 = por %p61, %p62
    %p65 = scmp.ne.s32.totalorder %s50, %s64
    %p66 = scmp.eq.s32.totalorder %s19, 0
    %p67 = por %p65, %p66
    %s69 = sadd.s32 %s68, 1
    %p72 = scmp.eq.s32.totalorder %s13, 1
    %p73 = scmp.ne.s32.totalorder %s68, %s70
    %p74 = scmp.eq.s32.totalorder %s13, 0
    %p75 = por %p73, %p74
    %p76 = scmp.ne.s32.totalorder %s68, %s70
    %p77 = scmp.eq.s32.totalorder %s18, 1
    %p78 = por %p76, %p77
    %p79 = scmp.ne.s32.totalorder %s70, %s71
    %p80 = scmp.eq.s32.totalorder %s18, 0
    %p81 = por %p79, %p80
    %p82 = scmp.ne.s32.totalorder %s70, %s71
    %p83 = scmp.eq.s32.totalorder %s19, 1
    %p84 = por %p82, %p83
    %p86 = scmp.ne.s32.totalorder %s71, %s85
    %p87 = scmp.eq.s32.totalorder %s19, 0
    %p88 = por %p86, %p87
    %s90 = sadd.s32 %s89, 1
    %p93 = scmp.eq.s32.totalorder %s13, 1
    %p94 = scmp.ne.s32.totalorder %s89, %s91
    %p95 = scmp.eq.s32.totalorder %s13, 0
    %p96 = por %p94, %p95
    %p97 = scmp.ne.s32.totalorder %s89, %s91
    %p98 = scmp.eq.s32.totalorder %s18, 1
    %p99 = por %p97, %p98
    %p100 = scmp.ne.s32.totalorder %s91, %s92
    %p101 = scmp.eq.s32.totalorder %s18, 0
    %p102 = por %p100, %p101
    %p103 = scmp.ne.s32.totalorder %s91, %s92
    %p104 = scmp.eq.s32.totalorder %s19, 1
    %p105 = por %p103, %p104
    %p107 = scmp.ne.s32.totalorder %s92, %s106
    %p108 = scmp.eq.s32.totalorder %s19, 0
    %p109 = por %p107, %p108
    %s111 = sadd.s32 %s110, 1
    %p114 = scmp.eq.s32.totalorder %s13, 1
    %p115 = scmp.ne.s32.totalorder %s110, %s112
    %p116 = scmp.eq.s32.totalorder %s13, 0
    %p117 = por %p115, %p116
    %p118 = scmp.ne.s32.totalorder %s110, %s112
    %p119 = scmp.eq.s32.totalorder %s18, 1
    %p120 = por %p118, %p119
    %p121 = scmp.ne.s32.totalorder %s112, %s113
    %p122 = scmp.eq.s32.totalorder %s18, 0
    %p123 = por %p121, %p122
    %p124 = scmp.ne.s32.totalorder %s112, %s113
    %p125 = scmp.eq.s32.totalorder %s19, 1
    %p126 = por %p124, %p125
    %p128 = scmp.ne.s32.totalorder %s113, %s127
    %p129 = scmp.eq.s32.totalorder %s19, 0
    %p130 = por %p128, %p129
    %s132 = sadd.s32 %s131, 1
    %p135 = scmp.eq.s32.totalorder %s13, 1
    %p136 = scmp.ne.s32.totalorder %s131, %s133
    %p137 = scmp.eq.s32.totalorder %s13, 0
    %p138 = por %p136, %p137
    %p139 = scmp.ne.s32.totalorder %s131, %s133
    %p140 = scmp.eq.s32.totalorder %s18, 1
    %p141 = por %p139, %p140
    %p142 = scmp.ne.s32.totalorder %s133, %s134
    %p143 = scmp.eq.s32.totalorder %s18, 0
    %p144 = por %p142, %p143
    %p145 = scmp.ne.s32.totalorder %s133, %s134
    %p146 = scmp.eq.s32.totalorder %s19, 1
    %p147 = por %p145, %p146
    %p149 = scmp.ne.s32.totalorder %s134, %s148
    %p150 = scmp.eq.s32.totalorder %s19, 0
    %p151 = por %p149, %p150
    %s153 = sadd.s32 %s152, 1
    %p156 = scmp.eq.s32.totalorder %s13, 1
    %p157 = scmp.ne.s32.totalorder %s152, %s154
    %p158 = scmp.eq.s32.totalorder %s13, 0
    %p159 = por %p157, %p158
    %p160 = scmp.ne.s32.totalorder %s152, %s154
    %p161 = scmp.eq.s32.totalorder %s18, 1
    %p162 = por %p160, %p161
    %p163 = scmp.ne.s32.totalorder %s154, %s155
    %p164 = scmp.eq.s32.totalorder %s18, 0
    %p165 = por %p163, %p164
    %p166 = scmp.ne.s32.totalorder %s154, %s155
    %p167 = scmp.eq.s32.totalorder %s19, 1
    %p168 = por %p166, %p167
    %p170 = scmp.ne.s32.totalorder %s155, %s169
    %p171 = scmp.eq.s32.totalorder %s19, 0
    %p172 = por %p170, %p171
    %s173 = ssub.s32 %s13, %s20
    %p174 = scmp.eq.s32.totalorder %s173, 0
    %s176 = sadd.s32 %s175, 1
    %s177 = scalar_select %p174, %s175, %s176
    %p180 = pneg %p174
    %p181 = scmp.eq.s32.totalorder %s13, 1
    %p182 = por %p180, %p181
    %p183 = scmp.ne.s32.totalorder %s175, %s178
    %p184 = scmp.eq.s32.totalorder %s13, 0
    %p185 = por %p183, %p184
    %p186 = scmp.ne.s32.totalorder %s175, %s178
    %p187 = scmp.eq.s32.totalorder %s18, 1
    %p188 = por %p186, %p187
    %p189 = scmp.ne.s32.totalorder %s178, %s179
    %p190 = scmp.eq.s32.totalorder %s18, 0
    %p191 = por %p189, %p190
    %p192 = scmp.ne.s32.totalorder %s178, %s179
    %p193 = scmp.eq.s32.totalorder %s19, 1
    %p194 = por %p192, %p193
    %p196 = scmp.ne.s32.totalorder %s179, %s195
    %p197 = scmp.eq.s32.totalorder %s19, 0
    %p198 = por %p196, %p197
    %p199 = scmp.le.s32.totalorder 1, %s13
    %p200 = scmp.lt.s32.totalorder %s13, 3
    %p201 = pnand %p199, %p200
    %p202 = pneg %p201
    // Predicated region
    $region9: #{discrete_sac_actor_forward.1} parent=5 // pred_check
      _
    $region10: #{discrete_sac_actor_forward.1} parent=5 // pred_check_branch
      %204 = sbr.rel (%p201) target = $region12
    $region11: #{discrete_sac_actor_forward.1} parent=5 // pred_region
      %s205 = ssub.s32 %s13, 1
      // Predicated region
      $region13: #{discrete_sac_actor_forward.1} parent=11 // pred_check
        %p206 = pneg %p60
      $region14: #{discrete_sac_actor_forward.1} parent=11 // pred_check_branch
        %208 = sbr.rel (%p206) target = $region16
      $region15: #{discrete_sac_actor_forward.1} parent=11 // pred_region
        _
      $region16: #{discrete_sac_actor_forward.1} parent=11 // pred_fallthru
        _
      // Predicated region
      $region17: #{discrete_sac_actor_forward.1} parent=11 // pred_check
        %p209 = pneg %p81
      $region18: #{discrete_sac_actor_forward.1} parent=11 // pred_check_branch
        %211 = sbr.rel (%p209) target = $region20
      $region19: #{discrete_sac_actor_forward.1} parent=11 // pred_region
        _
      $region20: #{discrete_sac_actor_forward.1} parent=11 // pred_fallthru
        _
      // Predicated region
      $region21: #{discrete_sac_actor_forward.1} parent=11 // pred_check
        %p212 = pneg %p102
      $region22: #{discrete_sac_actor_forward.1} parent=11 // pred_check_branch
        %214 = sbr.rel (%p212) target = $region24
      $region23: #{discrete_sac_actor_forward.1} parent=11 // pred_region
        _
      $region24: #{discrete_sac_actor_forward.1} parent=11 // pred_fallthru
        _
      // Predicated region
      $region25: #{discrete_sac_actor_forward.1} parent=11 // pred_check
        %p215 = pneg %p123
      $region26: #{discrete_sac_actor_forward.1} parent=11 // pred_check_branch
        %217 = sbr.rel (%p215) target = $region28
      $region27: #{discrete_sac_actor_forward.1} parent=11 // pred_region
        _
      $region28: #{discrete_sac_actor_forward.1} parent=11 // pred_fallthru
        _
      // Predicated region
      $region29: #{discrete_sac_actor_forward.1} parent=11 // pred_check
        %p218 = pneg %p144
      $region30: #{discrete_sac_actor_forward.1} parent=11 // pred_check_branch
        %220 = sbr.rel (%p218) target = $region32
      $region31: #{discrete_sac_actor_forward.1} parent=11 // pred_region
        _
      $region32: #{discrete_sac_actor_forward.1} parent=11 // pred_fallthru
        _
      // Predicated region
      $region33: #{discrete_sac_actor_forward.1} parent=11 // pred_check
        %p221 = pneg %p165
      $region34: #{discrete_sac_actor_forward.1} parent=11 // pred_check_branch
        %223 = sbr.rel (%p221) target = $region36
      $region35: #{discrete_sac_actor_forward.1} parent=11 // pred_region
        _
      $region36: #{discrete_sac_actor_forward.1} parent=11 // pred_fallthru
        _
    $region12: #{discrete_sac_actor_forward.1} parent=5 // pred_fallthru
      _
    %p224 = scmp.lt.s32.totalorder %s13, 2
    // Predicated region
    $region37: #{discrete_sac_actor_forward.1} parent=5 // pred_check
      %p225 = pneg %p224
    $region38: #{discrete_sac_actor_forward.1} parent=5 // pred_check_branch
      %227 = sbr.rel (%p225) target = $region40
    $region39: #{discrete_sac_actor_forward.1} parent=5 // pred_region
      // Predicated region
      $region41: #{discrete_sac_actor_forward.1} parent=39 // pred_check
        %p228 = pneg %p33
      $region42: #{discrete_sac_actor_forward.1} parent=39 // pred_check_branch
        %230 = sbr.rel (%p228) target = $region44
      $region43: #{discrete_sac_actor_forward.1} parent=39 // pred_region
        %s231 = smul.u32 2, %s13
        %p232 = scmp.lt.s32.totalorder %s231, 3
        %s233 = scalar_select %p232, %s231, 3
        %s234 = smul.addr %s233, 8
        %s235 = scalar_lea.vmem %s0, %s234
        %s236 = smul.u32 2, %s13
      $region44: #{discrete_sac_actor_forward.1} parent=39 // pred_fallthru
        _
    $region40: #{discrete_sac_actor_forward.1} parent=5 // pred_fallthru
      _
    %p237 = scmp.le.s32.totalorder 1, %s13
    %p238 = scmp.lt.s32.totalorder %s13, 3
    %p239 = pnand %p237, %p238
    %p240 = pneg %p239
    // Predicated region
    $region45: #{discrete_sac_actor_forward.1} parent=5 // pred_check
      _
    $region46: #{discrete_sac_actor_forward.1} parent=5 // pred_check_branch
      %242 = sbr.rel (%p239) target = $region48
    $region47: #{discrete_sac_actor_forward.1} parent=5 // pred_region
      %s243 = ssub.s32 %s13, 1
      %s244 = smul.u32 2, %s18
      %p245 = scmp.lt.s32.totalorder %s244, 3
      %s246 = scalar_select %p245, %s244, 3
      %s247 = smul.addr %s246, 8
      %s248 = scalar_lea.vmem %s0, %s247
      %p249 = pneg %p39
      %p250 = pneg %p36
      %p251 = pneg %p60
      %p252 = pneg %p57
      %p253 = pneg %p81
      %p254 = pneg %p78
      %p255 = pneg %p102
      %p256 = pneg %p99
      %p257 = pneg %p123
      %p258 = pneg %p120
      %p259 = pneg %p144
      %p260 = pneg %p141
      %p261 = pneg %p165
      %p262 = pneg %p162
      %p263 = pneg %p191
      %p264 = pneg %p188
      %s265 = smul.u32 2, %s18
      %p266 = scmp.lt.s32.totalorder %s265, 3
      %s267 = scalar_select %p266, %s265, 3
      %s268 = smul.addr %s267, 8
      %s269 = scalar_lea.vmem %s7, %s268
      %s270 = smul.u32 2, %s18
      %p271 = scmp.lt.s32.totalorder %s270, 3
      %s272 = scalar_select %p271, %s270, 3
      %s273 = smul.addr %s272, 8
      %s274 = scalar_lea.vmem %s0, %s273
      %s275 = smul.u32 2, %s18
      %s276 = smul.u32 2, %s18
      %p277 = scmp.lt.s32.totalorder %s276, 3
      %s278 = scalar_select %p277, %s276, 3
      %s279 = smul.addr %s278, 8
      %s280 = scalar_lea.vmem %s7, %s279
      %s281 = smul.u32 2, %s18
      %v282 = vld [vmem:[%s274] sm:$0xff]
      %v283 = vld [vmem:[%s274 + $0x8] sm:$0xff]
      %v284 = vld [vmem:[%s1] sm:$0xff]
      %v285 = vld [vmem:[%s1 + $0x8] sm:$0xff]
      %v286 = vld [vmem:[%s2] sm:$0x1]
      %v288 = vlaneseq
      %v289 = vshrl.u32 %v288, 7
      %v290 = vsub.s32 0, %v289
      %v291 = vrot.slane %v286, %v290
      %vm293 = vcmask 130048
      %v295 = vsel %vm293, %v282, 0
      %v298 = vsel %vm293, %v283, 0
      %300 = vmatprep.subr.mxu0 0.0
      %301 = vmatpush1.msra.mxu0 %v284
      %302 = vmatprep.subr.mxu0 0.0
      %303 = vmatpush1.msra.mxu0 %v285
      %304 = vmatprep.subr.mxu0 0.0
      %305 = vmatpush1.msra.mxu0 0.0
      %306 = vmatprep.subr.mxu0 0.0
      %307 = vmatpush1.msra.mxu0 0.0
      %308 = vmatprep.subr.mxu0 0.0
      %309 = vmatpush1.msra.mxu0 0.0
      %310 = vmatprep.subr.mxu0 0.0
      %311 = vmatpush1.msra.mxu0 0.0
      %312 = vmatprep.subr.mxu0 0.0
      %313 = vmatpush1.msra.mxu0 0.0
      %314 = vmatprep.subr.mxu0 0.0
      %315 = vmatpush1.msra.mxu0 0.0
      %316 = vmatprep.subr.mxu0 0.0
      %317 = vmatpush1.msra.mxu0 0.0
      %318 = vmatprep.subr.mxu0 0.0
      %319 = vmatpush1.msra.mxu0 0.0
      %320 = vmatprep.subr.mxu0 0.0
      %321 = vmatpush1.msra.mxu0 0.0
      %322 = vmatprep.subr.mxu0 0.0
      %323 = vmatpush1.msra.mxu0 0.0
      %324 = vmatprep.subr.mxu0 0.0
      %325 = vmatpush1.msra.mxu0 0.0
      %326 = vmatprep.subr.mxu0 0.0
      %327 = vmatpush1.msra.mxu0 0.0
      %328 = vmatprep.subr.mxu0 0.0
      %329 = vmatpush1.msra.mxu0 0.0
      %330 = vmatprep.subr.mxu0 0.0
      %331 = vmatpush1.msra.mxu0 0.0
      %332 = vmatprep.subr.mxu0 0.0
      %333 = vmatpush1.msra.mxu0 0.0
      %334 = vmatprep.subr.mxu0 0.0
      %335 = vmatpush1.msra.mxu0 0.0
      %336 = vmatprep.subr.mxu0 0.0
      %337 = vmatpush1.msra.mxu0 0.0
      %338 = vmatprep.subr.mxu0 0.0
      %339 = vmatpush1.msra.mxu0 0.0
      %340 = vmatprep.subr.mxu0 0.0
      %341 = vmatpush1.msra.mxu0 0.0
      %342 = vmatprep.subr.mxu0 0.0
      %343 = vmatpush1.msra.mxu0 0.0
      %344 = vmatprep.subr.mxu0 0.0
      %345 = vmatpush1.msra.mxu0 0.0
      %346 = vmatprep.subr.mxu0 0.0
      %347 = vmatpush1.msra.mxu0 0.0
      %348 = vmatprep.subr.mxu0 0.0
      %349 = vmatpush1.msra.mxu0 0.0
      %350 = vmatprep.subr.mxu0 0.0
      %351 = vmatpush1.msra.mxu0 0.0
      %352 = vmatprep.subr.mxu0 0.0
      %353 = vmatpush1.msra.mxu0 0.0
      %354 = vmatprep.subr.mxu0 0.0
      %355 = vmatpush1.msra.mxu0 0.0
      %356 = vmatprep.subr.mxu0 0.0
      %357 = vmatpush1.msra.mxu0 0.0
      %358 = vmatprep.subr.mxu0 0.0
      %359 = vmatpush1.msra.mxu0 0.0
      %360 = vmatprep.subr.mxu0 0.0
      %361 = vmatpush1.msra.mxu0 0.0
      %362 = vmatprep.subr.mxu0 0.0
      %363 = vmatpush1.msra.mxu0 0.0
      %364 = vmatprep.mubr.f32.mxu0 0.0
      %365 = vmatmul.mubr.f32.gmra.mrb[0].mxu0 %v295
      %v366 = vpop.f32.mrb[0].mxu0
      %v367 = vadd.f32 %v291, %v366
      %v368 = vpop.f32.mrb[0].mxu0
      %369 = vmatprep.mubr.f32.mxu0 0.0
      %370 = vmatmul.mubr.f32.gmra.mrb[0].mxu0 %v298
      %v371 = vpop.f32.mrb[0].mxu0
      %v372 = vadd.f32 %v291, %v371
      %v373 = vpop.f32.mrb[0].mxu0
      %374 = vdwg.mxu0
      %v375 = vmax.f32 %v367, 0.0
      %v376 = vmax.f32 %v372, 0.0
      %v377 = vld [vmem:[%s3] sm:$0xff]
      %v378 = vld [vmem:[%s3 + $0x8] sm:$0xff]
      %v379 = vld [vmem:[%s3 + $0x10] sm:$0xff]
      %v380 = vld [vmem:[%s3 + $0x18] sm:$0xff]
      %v381 = vld [vmem:[%s3 + $0x20] sm:$0xff]
      %v382 = vld [vmem:[%s3 + $0x28] sm:$0xff]
      %v383 = vld [vmem:[%s3 + $0x30] sm:$0xff]
      %v384 = vld [vmem:[%s3 + $0x38] sm:$0xff]
      %v385 = vld [vmem:[%s3 + $0x40] sm:$0xff]
      %v386 = vld [vmem:[%s3 + $0x48] sm:$0xff]
      %v387 = vld [vmem:[%s3 + $0x50] sm:$0xff]
      %v388 = vld [vmem:[%s3 + $0x58] sm:$0xff]
      %v389 = vld [vmem:[%s3 + $0x60] sm:$0xff]
      %v390 = vld [vmem:[%s3 + $0x68] sm:$0xff]
      %v391 = vld [vmem:[%s3 + $0x70] sm:$0xff]
      %v392 = vld [vmem:[%s3 + $0x78] sm:$0xff]
      %v393 = vld [vmem:[%s4] sm:$0x1]
      %v395 = vlaneseq
      %v396 = vshrl.u32 %v395, 7
      %v397 = vsub.s32 0, %v396
      %v398 = vrot.slane %v393, %v397
      %400 = vmatprep.subr.mxu0 0.0
      %401 = vmatpush1.msra.mxu0 %v377
      %402 = vmatprep.subr.mxu0 0.0
      %403 = vmatpush1.msra.mxu0 %v378
      %404 = vmatprep.subr.mxu0 0.0
      %405 = vmatpush1.msra.mxu0 %v379
      %406 = vmatprep.subr.mxu0 0.0
      %407 = vmatpush1.msra.mxu0 %v380
      %408 = vmatprep.subr.mxu0 0.0
      %409 = vmatpush1.msra.mxu0 %v381
      %410 = vmatprep.subr.mxu0 0.0
      %411 = vmatpush1.msra.mxu0 %v382
      %412 = vmatprep.subr.mxu0 0.0
      %413 = vmatpush1.msra.mxu0 %v383
      %414 = vmatprep.subr.mxu0 0.0
      %415 = vmatpush1.msra.mxu0 %v384
      %416 = vmatprep.subr.mxu0 0.0
      %417 = vmatpush1.msra.mxu0 %v385
      %418 = vmatprep.subr.mxu0 0.0
      %419 = vmatpush1.msra.mxu0 %v386
      %420 = vmatprep.subr.mxu0 0.0
      %421 = vmatpush1.msra.mxu0 %v387
      %422 = vmatprep.subr.mxu0 0.0
      %423 = vmatpush1.msra.mxu0 %v388
      %424 = vmatprep.subr.mxu0 0.0
      %425 = vmatpush1.msra.mxu0 %v389
      %426 = vmatprep.subr.mxu0 0.0
      %427 = vmatpush1.msra.mxu0 %v390
      %428 = vmatprep.subr.mxu0 0.0
      %429 = vmatpush1.msra.mxu0 %v391
      %430 = vmatprep.subr.mxu0 0.0
      %431 = vmatpush1.msra.mxu0 %v392
      %432 = vmatprep.subr.mxu0 0.0
      %433 = vmatpush1.msra.mxu0 0.0
      %434 = vmatprep.subr.mxu0 0.0
      %435 = vmatpush1.msra.mxu0 0.0
      %436 = vmatprep.subr.mxu0 0.0
      %437 = vmatpush1.msra.mxu0 0.0
      %438 = vmatprep.subr.mxu0 0.0
      %439 = vmatpush1.msra.mxu0 0.0
      %440 = vmatprep.subr.mxu0 0.0
      %441 = vmatpush1.msra.mxu0 0.0
      %442 = vmatprep.subr.mxu0 0.0
      %443 = vmatpush1.msra.mxu0 0.0
      %444 = vmatprep.subr.mxu0 0.0
      %445 = vmatpush1.msra.mxu0 0.0
      %446 = vmatprep.subr.mxu0 0.0
      %447 = vmatpush1.msra.mxu0 0.0
      %448 = vmatprep.subr.mxu0 0.0
      %449 = vmatpush1.msra.mxu0 0.0
      %450 = vmatprep.subr.mxu0 0.0
      %451 = vmatpush1.msra.mxu0 0.0
      %452 = vmatprep.subr.mxu0 0.0
      %453 = vmatpush1.msra.mxu0 0.0
      %454 = vmatprep.subr.mxu0 0.0
      %455 = vmatpush1.msra.mxu0 0.0
      %456 = vmatprep.subr.mxu0 0.0
      %457 = vmatpush1.msra.mxu0 0.0
      %458 = vmatprep.subr.mxu0 0.0
      %459 = vmatpush1.msra.mxu0 0.0
      %460 = vmatprep.subr.mxu0 0.0
      %461 = vmatpush1.msra.mxu0 0.0
      %462 = vmatprep.subr.mxu0 0.0
      %463 = vmatpush1.msra.mxu0 0.0
      %464 = vmatprep.mubr.f32.mxu0 0.0
      %465 = vmatmul.mubr.f32.gmra.mrb[0].mxu0 %v375
      %v466 = vpop.f32.mrb[0].mxu0
      %v467 = vadd.f32 %v398, %v466
      %v468 = vpop.f32.mrb[0].mxu0
      %469 = vmatprep.mubr.f32.mxu0 0.0
      %470 = vmatmul.mubr.f32.gmra.mrb[0].mxu0 %v376
      %v471 = vpop.f32.mrb[0].mxu0
      %v472 = vadd.f32 %v398, %v471
      %v473 = vpop.f32.mrb[0].mxu0
      %474 = vdwg.mxu0
      %v475 = vmax.f32 %v467, 0.0
      %v476 = vmax.f32 %v472, 0.0
      %v477 = vld [vmem:[%s5] sm:$0xff]
      %v478 = vld [vmem:[%s5 + $0x8] sm:$0xff]
      %v479 = vld [vmem:[%s5 + $0x10] sm:$0xff]
      %v480 = vld [vmem:[%s5 + $0x18] sm:$0xff]
      %v481 = vld [vmem:[%s5 + $0x20] sm:$0xff]
      %v482 = vld [vmem:[%s5 + $0x28] sm:$0xff]
      %v483 = vld [vmem:[%s5 + $0x30] sm:$0xff]
      %v484 = vld [vmem:[%s5 + $0x38] sm:$0xff]
      %v485 = vld [vmem:[%s5 + $0x40] sm:$0xff]
      %v486 = vld [vmem:[%s5 + $0x48] sm:$0xff]
      %v487 = vld [vmem:[%s5 + $0x50] sm:$0xff]
      %v488 = vld [vmem:[%s5 + $0x58] sm:$0xff]
      %v489 = vld [vmem:[%s5 + $0x60] sm:$0xff]
      %v490 = vld [vmem:[%s5 + $0x68] sm:$0xff]
      %v491 = vld [vmem:[%s5 + $0x70] sm:$0xff]
      %v492 = vld [vmem:[%s5 + $0x78] sm:$0xff]
      %v493 = vld [vmem:[%s6] sm:$0x1]
      %v495 = vlaneseq
      %v496 = vshrl.u32 %v495, 7
      %v497 = vsub.s32 0, %v496
      %v498 = vrot.slane %v493, %v497
      %500 = vmatprep.subr.mxu0 0.0
      %501 = vmatpush1.msra.mxu0 %v477
      %502 = vmatprep.subr.mxu0 0.0
      %503 = vmatpush1.msra.mxu0 %v478
      %504 = vmatprep.subr.mxu0 0.0
      %505 = vmatpush1.msra.mxu0 %v479
      %506 = vmatprep.subr.mxu0 0.0
      %507 = vmatpush1.msra.mxu0 %v480
      %508 = vmatprep.subr.mxu0 0.0
      %509 = vmatpush1.msra.mxu0 %v481
      %510 = vmatprep.subr.mxu0 0.0
      %511 = vmatpush1.msra.mxu0 %v482
      %512 = vmatprep.subr.mxu0 0.0
      %513 = vmatpush1.msra.mxu0 %v483
      %514 = vmatprep.subr.mxu0 0.0
      %515 = vmatpush1.msra.mxu0 %v484
      %516 = vmatprep.subr.mxu0 0.0
      %517 = vmatpush1.msra.mxu0 %v485
      %518 = vmatprep.subr.mxu0 0.0
      %519 = vmatpush1.msra.mxu0 %v486
      %520 = vmatprep.subr.mxu0 0.0
      %521 = vmatpush1.msra.mxu0 %v487
      %522 = vmatprep.subr.mxu0 0.0
      %523 = vmatpush1.msra.mxu0 %v488
      %524 = vmatprep.subr.mxu0 0.0
      %525 = vmatpush1.msra.mxu0 %v489
      %526 = vmatprep.subr.mxu0 0.0
      %527 = vmatpush1.msra.mxu0 %v490
      %528 = vmatprep.subr.mxu0 0.0
      %529 = vmatpush1.msra.mxu0 %v491
      %530 = vmatprep.subr.mxu0 0.0
      %531 = vmatpush1.msra.mxu0 %v492
      %532 = vmatprep.subr.mxu0 0.0
      %533 = vmatpush1.msra.mxu0 0.0
      %534 = vmatprep.subr.mxu0 0.0
      %535 = vmatpush1.msra.mxu0 0.0
      %536 = vmatprep.subr.mxu0 0.0
      %537 = vmatpush1.msra.mxu0 0.0
      %538 = vmatprep.subr.mxu0 0.0
      %539 = vmatpush1.msra.mxu0 0.0
      %540 = vmatprep.subr.mxu0 0.0
      %541 = vmatpush1.msra.mxu0 0.0
      %542 = vmatprep.subr.mxu0 0.0
      %543 = vmatpush1.msra.mxu0 0.0
      %544 = vmatprep.subr.mxu0 0.0
      %545 = vmatpush1.msra.mxu0 0.0
      %546 = vmatprep.subr.mxu0 0.0
      %547 = vmatpush1.msra.mxu0 0.0
      %548 = vmatprep.subr.mxu0 0.0
      %549 = vmatpush1.msra.mxu0 0.0
      %550 = vmatprep.subr.mxu0 0.0
      %551 = vmatpush1.msra.mxu0 0.0
      %552 = vmatprep.subr.mxu0 0.0
      %553 = vmatpush1.msra.mxu0 0.0
      %554 = vmatprep.subr.mxu0 0.0
      %555 = vmatpush1.msra.mxu0 0.0
      %556 = vmatprep.subr.mxu0 0.0
      %557 = vmatpush1.msra.mxu0 0.0
      %558 = vmatprep.subr.mxu0 0.0
      %559 = vmatpush1.msra.mxu0 0.0
      %560 = vmatprep.subr.mxu0 0.0
      %561 = vmatpush1.msra.mxu0 0.0
      %562 = vmatprep.subr.mxu0 0.0
      %563 = vmatpush1.msra.mxu0 0.0
      %564 = vmatprep.mubr.f32.mxu0 0.0
      %565 = vmatmul.mubr.f32.gmra.mrb[0].mxu0 %v475
      %v566 = vpop.f32.mrb[0].mxu0
      %v567 = vadd.f32 %v498, %v566
      %v568 = vpop.f32.mrb[0].mxu0
      %569 = vmatprep.mubr.f32.mxu0 0.0
      %570 = vmatmul.mubr.f32.gmra.mrb[0].mxu0 %v476
      %v571 = vpop.f32.mrb[0].mxu0
      %v572 = vadd.f32 %v498, %v571
      %v573 = vpop.f32.mrb[0].mxu0
      %574 = vdwg.mxu0
      %vm575 = vcmask 48128
      %576 = vst.msk [vmem:[%s280] sm:$0xff] %vm575, %v567
      %577 = vst.msk [vmem:[%s280 + $0x8] sm:$0xff] %vm575, %v572
      %s578 = smul.u32 2, %s18
      %p579 = scmp.lt.s32.totalorder %s578, 3
      %s580 = scalar_select %p579, %s578, 3
      %s581 = smul.addr %s580, 8
      %s582 = scalar_lea.vmem %s7, %s581
      // Predicated region
      $region49: #{discrete_sac_actor_forward.1} parent=47 // pred_check
        %p583 = pneg %p188
      $region50: #{discrete_sac_actor_forward.1} parent=47 // pred_check_branch
        %585 = sbr.rel (%p583) target = $region52
      $region51: #{discrete_sac_actor_forward.1} parent=47 // pred_region
        %s586 = smul.u32 2, %s18
      $region52: #{discrete_sac_actor_forward.1} parent=47 // pred_fallthru
        _
    $region48: #{discrete_sac_actor_forward.1} parent=5 // pred_fallthru
      _
    %p587 = scmp.le.s32.totalorder 2, %s13
    // Predicated region
    $region53: #{discrete_sac_actor_forward.1} parent=5 // pred_check
      %p588 = pneg %p587
    $region54: #{discrete_sac_actor_forward.1} parent=5 // pred_check_branch
      %590 = sbr.rel (%p588) target = $region56
    $region55: #{discrete_sac_actor_forward.1} parent=5 // pred_region
      %s591 = ssub.s32 %s13, 2
      // Predicated region
      $region57: #{discrete_sac_actor_forward.1} parent=55 // pred_check
        %p592 = pneg %p194
      $region58: #{discrete_sac_actor_forward.1} parent=55 // pred_check_branch
        %594 = sbr.rel (%p592) target = $region60
      $region59: #{discrete_sac_actor_forward.1} parent=55 // pred_region
        %s595 = smul.u32 2, %s19
        %p596 = scmp.lt.s32.totalorder %s595, 3
        %s597 = scalar_select %p596, %s595, 3
        %s598 = smul.addr %s597, 8
        %s599 = scalar_lea.vmem %s7, %s598
      $region60: #{discrete_sac_actor_forward.1} parent=55 // pred_fallthru
        _
    $region56: #{discrete_sac_actor_forward.1} parent=5 // pred_fallthru
      _
  $region6: #{discrete_sac_actor_forward.1} parent=0 // loop_footer
    %s17 = sadd.s32 1, %s13
  $region7: #{discrete_sac_actor_forward.1} parent=0 // loop_footer_branch
    %12 = sbr.rel target = $region3
  $region8: #{discrete_sac_actor_forward.1} parent=0 // loop_exit
    _

</llo_original>
